<compile_context>
chip_gen: v7x
topology: tpu7x:2x2x1
jax: 0.10.0
libtpu: 0.0.40
codegen_flags: <defaults>
</compile_context>

<pallas_src>
import jax
import jax.numpy as jnp
from jax.experimental import pallas as pl
from jax.experimental.pallas import tpu as pltpu


def _i32(v: int) -> int:
    """Python int -> signed 32-bit value (for int32 constants)."""
    v &= 0xFFFFFFFF
    return v - (1 << 32) if v & 0x80000000 else v


_GOLD = _i32(0x9E3779B9)   # seed mixing constant
_MIX1 = _i32(0x7FEB352D)   # lowbias32 multipliers
_MIX2 = _i32(0x846CA68B)

_LANES = 128               # lane width of every in-kernel array
_EPS = 1e-5                # BatchNorm2d default eps


def model_new2_forward(x_nchw, w_conv, b_conv, seed):
    """x_nchw: (N,CI,H,W) f32, w_conv: (CO,CI,KH,KW), b_conv: (CO,), seed: int.

    Returns (out, bn):
      out = dropout(dropout(dropout(rand_like(conv(x)))))  -- the module's return value
      bn  = BatchNorm2d(conv(x), training)                 -- exercises the conv/BN path
    """
    N, CI, H, W = x_nchw.shape
    CO, _, KH, KW = w_conv.shape
    OH, OW = H - KH + 1, W - KW + 1
    HW = H * W
    CIN = CI * N           # input slab rows   r = ci*N + n
    CON = CO * N           # result slab rows  r = co*N + n
    KK = KH * KW
    M_TRUE = N * OH * OW   # true per-channel element count for BN statistics
    assert HW <= _LANES, "spatial plane must fit in one 128-lane row"

    def kernel(seed_ref, b_ref, x_ref, wb_ref, out_ref):
        # x_ref : (CIN, 128) VMEM, rows r = ci*N+n, lanes p = h*W+w (zeros for p >= H*W)
        # wb_ref: (CIN, CO*KK) VMEM, pre-broadcast weight columns
        # b_ref : (CO,) SMEM f32 ; seed_ref: (1,) SMEM i32
        # out_ref: (2*CON, 128) VMEM: rows [0,CON) = BN result, rows [CON,2*CON) = module output
        x = x_ref[...]                        # (CIN, 128)
        wb = wb_ref[...]                      # (CIN, CO*KK)

        # fused im2col: shifted[d][r, p] = x[r, p + (kh*W + kw)] (circular; wrap lanes unused)
        shifted = []
        for kh in range(KH):
            for kw in range(KW):
                dd = kh * W + kw
                if dd == 0:
                    shifted.append(x)
                else:
                    shifted.append(jnp.concatenate([x[:, dd:], x[:, :dd]], axis=1))

        # validity mask for BN statistics: p = oh*W + ow with oh < OH, ow < OW
        lane = jax.lax.broadcasted_iota(jnp.int32, (N, _LANES), 1)
        valid = (lane < ((OH - 1) * W + OW)) & ((lane % W) < OW)
        inv_cnt = jnp.float32(1.0 / M_TRUE)

        bn_blocks = []
        for co in range(CO):
            # conv: whole-slab multiply by (CIN,1) weight columns + one sublane-block add.
            acc = shifted[0] * wb[:, co * KK:co * KK + 1]
            for d in range(1, KK):
                acc = acc + shifted[d] * wb[:, co * KK + d:co * KK + d + 1]
            conv = acc[0:N, :]
            for ci in range(1, CI):
                conv = conv + acc[ci * N:(ci + 1) * N, :]
            conv = conv + b_ref[co]                               # (N, 128)

            # BatchNorm2d (training): biased batch stats over the M_TRUE valid positions.
            cm = jnp.where(valid, conv, 0.0)
            rowsum = jnp.sum(cm, axis=0, keepdims=True)           # (1, 128) sublane add
            rowsq = jnp.sum(cm * cm, axis=0, keepdims=True)       # (1, 128)
            s1 = jnp.sum(rowsum, axis=1, keepdims=True)           # (1, 1)  lane reduce
            s2 = jnp.sum(rowsq, axis=1, keepdims=True)            # (1, 1)
            mean = s1 * inv_cnt
            var = s2 * inv_cnt - mean * mean                      # one-pass E[x^2]-mean^2
            bn_blocks.append((conv - mean) * jax.lax.rsqrt(var + jnp.float32(_EPS)))
            # TODO(synk): BatchNorm running_mean/running_var updates (training-mode module
            # state) are not modeled; they do not affect the forward output.

        # rand_like + dropout(0.5)^3 fused: one 32-bit draw per element + one select.
        # Portable stateless lowbias32-style hash (same distribution as torch, not
        # bit-identical); uniform from the HIGH 23 bits, keep-bits from the low 3.
        # TODO(synk): could swap to pltpu.prng_seed/prng_random_bits on hardware only.
        row = jax.lax.broadcasted_iota(jnp.int32, (CON, _LANES), 0)
        col = jax.lax.broadcasted_iota(jnp.int32, (CON, _LANES), 1)
        v = row * jnp.int32(_LANES) + col + seed_ref[0] * jnp.int32(_GOLD)
        v = v ^ jax.lax.shift_right_logical(v, 16)
        v = v * jnp.int32(_MIX1)
        v = v ^ jax.lax.shift_right_logical(v, 15)
        v = v * jnp.int32(_MIX2)
        v = v ^ jax.lax.shift_right_logical(v, 16)
        u = jax.lax.shift_right_logical(v, 9).astype(jnp.float32) * jnp.float32(1.0 / 8388608.0)
        keep = jnp.bitwise_and(v, jnp.int32(7)) == jnp.int32(7)         # P(keep) = 0.5^3
        drop = jnp.where(keep, u * jnp.float32(8.0), jnp.float32(0.0))  # (CON, 128)

        # single merged (2*CON, 128) slab -> one full-tile, unmasked store
        out_ref[...] = jnp.concatenate(bn_blocks + [drop], axis=0)

    # ---- tiny wrapper glue (layout only) ----
    # input: (N,CI,H,W) -> (CI*N, H*W) -> zero-pad lanes to 128
    xr = jnp.transpose(x_nchw, (1, 0, 2, 3)).reshape(CIN, HW).astype(jnp.float32)
    xp = jnp.pad(xr, ((0, 0), (0, _LANES - HW)))
    # pre-broadcast weight columns: wb[ci*N+n, co*KK + kh*KW+kw] = w[co,ci,kh,kw]
    wbt = jnp.transpose(w_conv.reshape(CO, CI, KK), (0, 2, 1))           # [co, d, ci]
    wbt = jnp.broadcast_to(wbt[:, :, :, None], (CO, KK, CI, N))          # [co, d, ci, n]
    wbt = jnp.transpose(wbt, (2, 3, 0, 1)).reshape(CIN, CO * KK).astype(jnp.float32)
    b2 = b_conv.astype(jnp.float32)
    seed_arr = jnp.asarray([seed], dtype=jnp.int32)

    slab = pl.pallas_call(
        kernel,
        out_shape=jax.ShapeDtypeStruct((2 * CON, _LANES), jnp.float32),
        in_specs=[
            pl.BlockSpec(memory_space=pltpu.MemorySpace.SMEM),   # seed (1,)
            pl.BlockSpec(memory_space=pltpu.MemorySpace.SMEM),   # bias (CO,)
            pl.BlockSpec(memory_space=pltpu.MemorySpace.VMEM),   # x slab (CIN, 128)
            pl.BlockSpec(memory_space=pltpu.MemorySpace.VMEM),   # weight cols (CIN, CO*KK)
        ],
        out_specs=pl.BlockSpec(memory_space=pltpu.MemorySpace.VMEM),
    )(seed_arr, b2, xp, wbt)

    # one slice + reshape + single transpose on the combined slab
    both = slab[:, :HW].reshape(2, CO, N, H, W)[:, :, :, :OH, :OW]
    both = jnp.transpose(both, (0, 2, 1, 3, 4))      # (2, N, CO, OH, OW)
    bn = both[0]
    out = both[1]
    return out, bn


if __name__ == "__main__":
    key = jax.random.PRNGKey(0)
    k_x, k_w, k_b = jax.random.split(key, 3)

    # SMALL shapes consistent with the module: Conv2d(2, 2, kernel_size=2)
    N, CI, H, W = 2, 2, 8, 8
    CO, KH, KW = 2, 2, 2

    x = jax.random.normal(k_x, (N, CI, H, W), dtype=jnp.float32)
    fan_in = CI * KH * KW
    bound = 1.0 / (fan_in ** 0.5)
    conv_w = jax.random.uniform(k_w, (CO, CI, KH, KW), jnp.float32, -bound, bound)
    conv_b = jax.random.uniform(k_b, (CO,), jnp.float32, -bound, bound)

    fwd = jax.jit(model_new2_forward)
    out, bn = fwd(x, conv_w, conv_b, 1234)
    jax.block_until_ready(out)
    jax.block_until_ready(bn)

    assert out.shape == (N, CO, H - 1, W - 1) and out.dtype == jnp.float32
    assert bn.shape == (N, CO, H - 1, W - 1)

    # reference check for the deterministic conv + BatchNorm path
    conv_ref = jax.lax.conv_general_dilated(
        x, conv_w, window_strides=(1, 1), padding="VALID",
        dimension_numbers=("NCHW", "OIHW", "NCHW")) + conv_b.reshape(1, CO, 1, 1)
    m_ref = conv_ref.mean(axis=(0, 2, 3), keepdims=True)
    v_ref = ((conv_ref - m_ref) ** 2).mean(axis=(0, 2, 3), keepdims=True)
    bn_ref_val = (conv_ref - m_ref) * jax.lax.rsqrt(v_ref + 1e-5)
    assert bool(jnp.allclose(bn, bn_ref_val, atol=1e-3, rtol=1e-3))

    # dropout-chain output sanity: values are 0 or (uniform * 8) in [0, 8)
    assert bool(jnp.all((out == 0.0) | ((out >= 0.0) & (out < 8.0))))

    print("KERNEL_OK")
</pallas_src>

<mosaic_0001>
module attributes {stable_mosaic.version = 11 : i64} {
  func.func @kernel(%arg0: memref<1xi32, #tpu.memory_space<smem>>, %arg1: memref<2xf32, #tpu.memory_space<smem>>, %arg2: memref<4x128xf32, #tpu.memory_space<vmem>>, %arg3: memref<4x8xf32, #tpu.memory_space<vmem>>, %arg4: memref<8x128xf32, #tpu.memory_space<vmem>>) attributes {dimension_semantics = [], scalar_prefetch = 0 : i64, scratch_operands = 0 : i64, tpu.core_type = #tpu.core_type<tc>} {
    %c0 = arith.constant 0 : index
    %c0_0 = arith.constant 0 : index
    %0 = vector.load %arg2[%c0, %c0_0] : memref<4x128xf32, #tpu.memory_space<vmem>>, vector<4x128xf32>
    %c0_1 = arith.constant 0 : index
    %c0_2 = arith.constant 0 : index
    %1 = vector.load %arg3[%c0_1, %c0_2] : memref<4x8xf32, #tpu.memory_space<vmem>>, vector<4x8xf32>
    %2 = vector.extract_strided_slice %0 {offsets = [0, 1], sizes = [4, 127], strides = [1, 1]} : vector<4x128xf32> to vector<4x127xf32>
    %3 = vector.extract_strided_slice %0 {offsets = [0, 0], sizes = [4, 1], strides = [1, 1]} : vector<4x128xf32> to vector<4x1xf32>
    %4 = tpu.concatenate %2, %3 in 1 : vector<4x127xf32>, vector<4x1xf32> -> vector<4x128xf32>
    %5 = vector.extract_strided_slice %0 {offsets = [0, 8], sizes = [4, 120], strides = [1, 1]} : vector<4x128xf32> to vector<4x120xf32>
    %6 = vector.extract_strided_slice %0 {offsets = [0, 0], sizes = [4, 8], strides = [1, 1]} : vector<4x128xf32> to vector<4x8xf32>
    %7 = tpu.concatenate %5, %6 in 1 : vector<4x120xf32>, vector<4x8xf32> -> vector<4x128xf32>
    %8 = vector.extract_strided_slice %0 {offsets = [0, 9], sizes = [4, 119], strides = [1, 1]} : vector<4x128xf32> to vector<4x119xf32>
    %9 = vector.extract_strided_slice %0 {offsets = [0, 0], sizes = [4, 9], strides = [1, 1]} : vector<4x128xf32> to vector<4x9xf32>
    %10 = tpu.concatenate %8, %9 in 1 : vector<4x119xf32>, vector<4x9xf32> -> vector<4x128xf32>
    %11 = tpu.iota {dimensions = array<i32: 1>} : vector<2x128xi32>
    %c55_i32 = arith.constant 55 : i32
    %12 = vector.broadcast %c55_i32 : i32 to vector<2x128xi32>
    %13 = arith.cmpi slt, %11, %12 : vector<2x128xi32>
    %c8_i32 = arith.constant 8 : i32
    %c0_i32 = arith.constant 0 : i32
    %14 = arith.cmpi eq, %c8_i32, %c0_i32 : i32
    %c1_i32 = arith.constant 1 : i32
    %15 = arith.select %14, %c1_i32, %c8_i32 : i32
    %16 = vector.broadcast %15 : i32 to vector<2x128xi32>
    %17 = arith.remsi %11, %16 : vector<2x128xi32>
    %c0_i32_3 = arith.constant 0 : i32
    %18 = vector.broadcast %c0_i32_3 : i32 to vector<2x128xi32>
    %19 = arith.cmpi ne, %17, %18 : vector<2x128xi32>
    %c0_i32_4 = arith.constant 0 : i32
    %20 = vector.broadcast %c0_i32_4 : i32 to vector<2x128xi32>
    %21 = arith.cmpi slt, %17, %20 : vector<2x128xi32>
    %c0_i32_5 = arith.constant 0 : i32
    %22 = arith.cmpi slt, %15, %c0_i32_5 : i32
    %23 = vector.broadcast %22 : i1 to vector<2x128xi1>
    %24 = vector.broadcast %23 : vector<2x128xi1> to vector<2x128xi1>
    %25 = arith.xori %21, %24 : vector<2x128xi1>
    %26 = arith.andi %25, %19 : vector<2x128xi1>
    %27 = vector.broadcast %15 : i32 to vector<2x128xi32>
    %28 = arith.addi %17, %27 : vector<2x128xi32>
    %29 = arith.select %26, %28, %17 : vector<2x128xi1>, vector<2x128xi32>
    %c7_i32 = arith.constant 7 : i32
    %30 = vector.broadcast %c7_i32 : i32 to vector<2x128xi32>
    %31 = arith.cmpi slt, %29, %30 : vector<2x128xi32>
    %32 = arith.andi %13, %31 : vector<2x128xi1>
    %33 = vector.extract_strided_slice %1 {offsets = [0, 0], sizes = [4, 1], strides = [1, 1]} : vector<4x8xf32> to vector<4x1xf32>
    %34 = vector.broadcast %33 : vector<4x1xf32> to vector<4x128xf32>
    %35 = arith.mulf %0, %34 : vector<4x128xf32>
    %36 = vector.extract_strided_slice %1 {offsets = [0, 1], sizes = [4, 1], strides = [1, 1]} : vector<4x8xf32> to vector<4x1xf32>
    %37 = vector.broadcast %36 : vector<4x1xf32> to vector<4x128xf32>
    %38 = arith.mulf %4, %37 : vector<4x128xf32>
    %39 = arith.addf %35, %38 : vector<4x128xf32>
    %40 = vector.extract_strided_slice %1 {offsets = [0, 2], sizes = [4, 1], strides = [1, 1]} : vector<4x8xf32> to vector<4x1xf32>
    %41 = vector.broadcast %40 : vector<4x1xf32> to vector<4x128xf32>
    %42 = arith.mulf %7, %41 : vector<4x128xf32>
    %43 = arith.addf %39, %42 : vector<4x128xf32>
    %44 = vector.extract_strided_slice %1 {offsets = [0, 3], sizes = [4, 1], strides = [1, 1]} : vector<4x8xf32> to vector<4x1xf32>
    %45 = vector.broadcast %44 : vector<4x1xf32> to vector<4x128xf32>
    %46 = arith.mulf %10, %45 : vector<4x128xf32>
    %47 = arith.addf %43, %46 : vector<4x128xf32>
    %48 = vector.extract_strided_slice %47 {offsets = [0, 0], sizes = [2, 128], strides = [1, 1]} : vector<4x128xf32> to vector<2x128xf32>
    %49 = vector.extract_strided_slice %47 {offsets = [2, 0], sizes = [2, 128], strides = [1, 1]} : vector<4x128xf32> to vector<2x128xf32>
    %50 = arith.addf %48, %49 : vector<2x128xf32>
    %c0_6 = arith.constant 0 : index
    %51 = memref.load %arg1[%c0_6] : memref<2xf32, #tpu.memory_space<smem>>
    %52 = vector.broadcast %51 : f32 to vector<2x128xf32>
    %53 = arith.addf %50, %52 : vector<2x128xf32>
    %cst = arith.constant 0.000000e+00 : f32
    %54 = vector.broadcast %cst : f32 to vector<2x128xf32>
    %55 = arith.select %32, %53, %54 : vector<2x128xi1>, vector<2x128xf32>
    %cst_7 = arith.constant dense<0.000000e+00> : vector<128xf32>
    %56 = vector.multi_reduction <add>, %55, %cst_7 [0] : vector<2x128xf32> to vector<128xf32>
    %57 = vector.shape_cast %56 : vector<128xf32> to vector<1x128xf32>
    %58 = arith.mulf %55, %55 : vector<2x128xf32>
    %cst_8 = arith.constant dense<0.000000e+00> : vector<128xf32>
    %59 = vector.multi_reduction <add>, %58, %cst_8 [0] : vector<2x128xf32> to vector<128xf32>
    %60 = vector.shape_cast %59 : vector<128xf32> to vector<1x128xf32>
    %cst_9 = arith.constant dense<0.000000e+00> : vector<1xf32>
    %61 = vector.multi_reduction <add>, %57, %cst_9 [1] : vector<1x128xf32> to vector<1xf32>
    %62 = vector.shape_cast %61 : vector<1xf32> to vector<1x1xf32>
    %cst_10 = arith.constant dense<0.000000e+00> : vector<1xf32>
    %63 = vector.multi_reduction <add>, %60, %cst_10 [1] : vector<1x128xf32> to vector<1xf32>
    %64 = vector.shape_cast %63 : vector<1xf32> to vector<1x1xf32>
    %cst_11 = arith.constant 0.0102040814 : f32
    %65 = vector.broadcast %cst_11 : f32 to vector<1x1xf32>
    %66 = arith.mulf %62, %65 : vector<1x1xf32>
    %cst_12 = arith.constant 0.0102040814 : f32
    %67 = vector.broadcast %cst_12 : f32 to vector<1x1xf32>
    %68 = arith.mulf %64, %67 : vector<1x1xf32>
    %69 = arith.mulf %66, %66 : vector<1x1xf32>
    %70 = arith.subf %68, %69 : vector<1x1xf32>
    %71 = vector.broadcast %66 : vector<1x1xf32> to vector<2x128xf32>
    %72 = arith.subf %53, %71 : vector<2x128xf32>
    %cst_13 = arith.constant 9.99999974E-6 : f32
    %73 = vector.broadcast %cst_13 : f32 to vector<1x1xf32>
    %74 = arith.addf %70, %73 : vector<1x1xf32>
    %75 = math.rsqrt %74 : vector<1x1xf32>
    %76 = vector.broadcast %75 : vector<1x1xf32> to vector<2x128xf32>
    %77 = arith.mulf %72, %76 : vector<2x128xf32>
    %78 = vector.extract_strided_slice %1 {offsets = [0, 4], sizes = [4, 1], strides = [1, 1]} : vector<4x8xf32> to vector<4x1xf32>
    %79 = vector.broadcast %78 : vector<4x1xf32> to vector<4x128xf32>
    %80 = arith.mulf %0, %79 : vector<4x128xf32>
    %81 = vector.extract_strided_slice %1 {offsets = [0, 5], sizes = [4, 1], strides = [1, 1]} : vector<4x8xf32> to vector<4x1xf32>
    %82 = vector.broadcast %81 : vector<4x1xf32> to vector<4x128xf32>
    %83 = arith.mulf %4, %82 : vector<4x128xf32>
    %84 = arith.addf %80, %83 : vector<4x128xf32>
    %85 = vector.extract_strided_slice %1 {offsets = [0, 6], sizes = [4, 1], strides = [1, 1]} : vector<4x8xf32> to vector<4x1xf32>
    %86 = vector.broadcast %85 : vector<4x1xf32> to vector<4x128xf32>
    %87 = arith.mulf %7, %86 : vector<4x128xf32>
    %88 = arith.addf %84, %87 : vector<4x128xf32>
    %89 = vector.extract_strided_slice %1 {offsets = [0, 7], sizes = [4, 1], strides = [1, 1]} : vector<4x8xf32> to vector<4x1xf32>
    %90 = vector.broadcast %89 : vector<4x1xf32> to vector<4x128xf32>
    %91 = arith.mulf %10, %90 : vector<4x128xf32>
    %92 = arith.addf %88, %91 : vector<4x128xf32>
    %93 = vector.extract_strided_slice %92 {offsets = [0, 0], sizes = [2, 128], strides = [1, 1]} : vector<4x128xf32> to vector<2x128xf32>
    %94 = vector.extract_strided_slice %92 {offsets = [2, 0], sizes = [2, 128], strides = [1, 1]} : vector<4x128xf32> to vector<2x128xf32>
    %95 = arith.addf %93, %94 : vector<2x128xf32>
    %c1 = arith.constant 1 : index
    %96 = memref.load %arg1[%c1] : memref<2xf32, #tpu.memory_space<smem>>
    %97 = vector.broadcast %96 : f32 to vector<2x128xf32>
    %98 = arith.addf %95, %97 : vector<2x128xf32>
    %cst_14 = arith.constant 0.000000e+00 : f32
    %99 = vector.broadcast %cst_14 : f32 to vector<2x128xf32>
    %100 = arith.select %32, %98, %99 : vector<2x128xi1>, vector<2x128xf32>
    %cst_15 = arith.constant dense<0.000000e+00> : vector<128xf32>
    %101 = vector.multi_reduction <add>, %100, %cst_15 [0] : vector<2x128xf32> to vector<128xf32>
    %102 = vector.shape_cast %101 : vector<128xf32> to vector<1x128xf32>
    %103 = arith.mulf %100, %100 : vector<2x128xf32>
    %cst_16 = arith.constant dense<0.000000e+00> : vector<128xf32>
    %104 = vector.multi_reduction <add>, %103, %cst_16 [0] : vector<2x128xf32> to vector<128xf32>
    %105 = vector.shape_cast %104 : vector<128xf32> to vector<1x128xf32>
    %cst_17 = arith.constant dense<0.000000e+00> : vector<1xf32>
    %106 = vector.multi_reduction <add>, %102, %cst_17 [1] : vector<1x128xf32> to vector<1xf32>
    %107 = vector.shape_cast %106 : vector<1xf32> to vector<1x1xf32>
    %cst_18 = arith.constant dense<0.000000e+00> : vector<1xf32>
    %108 = vector.multi_reduction <add>, %105, %cst_18 [1] : vector<1x128xf32> to vector<1xf32>
    %109 = vector.shape_cast %108 : vector<1xf32> to vector<1x1xf32>
    %cst_19 = arith.constant 0.0102040814 : f32
    %110 = vector.broadcast %cst_19 : f32 to vector<1x1xf32>
    %111 = arith.mulf %107, %110 : vector<1x1xf32>
    %cst_20 = arith.constant 0.0102040814 : f32
    %112 = vector.broadcast %cst_20 : f32 to vector<1x1xf32>
    %113 = arith.mulf %109, %112 : vector<1x1xf32>
    %114 = arith.mulf %111, %111 : vector<1x1xf32>
    %115 = arith.subf %113, %114 : vector<1x1xf32>
    %116 = vector.broadcast %111 : vector<1x1xf32> to vector<2x128xf32>
    %117 = arith.subf %98, %116 : vector<2x128xf32>
    %cst_21 = arith.constant 9.99999974E-6 : f32
    %118 = vector.broadcast %cst_21 : f32 to vector<1x1xf32>
    %119 = arith.addf %115, %118 : vector<1x1xf32>
    %120 = math.rsqrt %119 : vector<1x1xf32>
    %121 = vector.broadcast %120 : vector<1x1xf32> to vector<2x128xf32>
    %122 = arith.mulf %117, %121 : vector<2x128xf32>
    %123 = tpu.iota {dimensions = array<i32: 0>} : vector<4x128xi32>
    %124 = tpu.iota {dimensions = array<i32: 1>} : vector<4x128xi32>
    %c128_i32 = arith.constant 128 : i32
    %125 = vector.broadcast %c128_i32 : i32 to vector<4x128xi32>
    %126 = arith.muli %123, %125 : vector<4x128xi32>
    %127 = arith.addi %126, %124 : vector<4x128xi32>
    %c0_22 = arith.constant 0 : index
    %128 = memref.load %arg0[%c0_22] : memref<1xi32, #tpu.memory_space<smem>>
    %c-1640531527_i32 = arith.constant -1640531527 : i32
    %129 = arith.muli %128, %c-1640531527_i32 : i32
    %130 = vector.broadcast %129 : i32 to vector<4x128xi32>
    %131 = arith.addi %127, %130 : vector<4x128xi32>
    %c16_i32 = arith.constant 16 : i32
    %132 = vector.broadcast %c16_i32 : i32 to vector<4x128xi32>
    %133 = arith.shrui %131, %132 : vector<4x128xi32>
    %134 = arith.xori %131, %133 : vector<4x128xi32>
    %c2146121005_i32 = arith.constant 2146121005 : i32
    %135 = vector.broadcast %c2146121005_i32 : i32 to vector<4x128xi32>
    %136 = arith.muli %134, %135 : vector<4x128xi32>
    %c15_i32 = arith.constant 15 : i32
    %137 = vector.broadcast %c15_i32 : i32 to vector<4x128xi32>
    %138 = arith.shrui %136, %137 : vector<4x128xi32>
    %139 = arith.xori %136, %138 : vector<4x128xi32>
    %c-2073254261_i32 = arith.constant -2073254261 : i32
    %140 = vector.broadcast %c-2073254261_i32 : i32 to vector<4x128xi32>
    %141 = arith.muli %139, %140 : vector<4x128xi32>
    %c16_i32_23 = arith.constant 16 : i32
    %142 = vector.broadcast %c16_i32_23 : i32 to vector<4x128xi32>
    %143 = arith.shrui %141, %142 : vector<4x128xi32>
    %144 = arith.xori %141, %143 : vector<4x128xi32>
    %c9_i32 = arith.constant 9 : i32
    %145 = vector.broadcast %c9_i32 : i32 to vector<4x128xi32>
    %146 = arith.shrui %144, %145 : vector<4x128xi32>
    %147 = arith.sitofp %146 : vector<4x128xi32> to vector<4x128xf32>
    %cst_24 = arith.constant 1.1920929E-7 : f32
    %148 = vector.broadcast %cst_24 : f32 to vector<4x128xf32>
    %149 = arith.mulf %147, %148 : vector<4x128xf32>
    %c7_i32_25 = arith.constant 7 : i32
    %150 = vector.broadcast %c7_i32_25 : i32 to vector<4x128xi32>
    %151 = arith.andi %144, %150 : vector<4x128xi32>
    %c7_i32_26 = arith.constant 7 : i32
    %152 = vector.broadcast %c7_i32_26 : i32 to vector<4x128xi32>
    %153 = arith.cmpi eq, %151, %152 : vector<4x128xi32>
    %cst_27 = arith.constant 8.000000e+00 : f32
    %154 = vector.broadcast %cst_27 : f32 to vector<4x128xf32>
    %155 = arith.mulf %149, %154 : vector<4x128xf32>
    %cst_28 = arith.constant 0.000000e+00 : f32
    %156 = vector.broadcast %cst_28 : f32 to vector<4x128xf32>
    %157 = arith.select %153, %155, %156 : vector<4x128xi1>, vector<4x128xf32>
    %158 = tpu.concatenate %77, %122, %157 in 0 : vector<2x128xf32>, vector<2x128xf32>, vector<4x128xf32> -> vector<8x128xf32>
    %c0_29 = arith.constant 0 : index
    %c0_30 = arith.constant 0 : index
    %159 = vector.load %arg4[%c0_29, %c0_30] : memref<8x128xf32, #tpu.memory_space<vmem>>, vector<8x128xf32>
    tpu.vector_store %arg4[%c0_29, %c0_30], %158 {strides = array<i32>} : memref<8x128xf32, #tpu.memory_space<vmem>>, vector<8x128xf32>,
    return
  }
}

</mosaic_0001>

<llo_original>
// kernel: model_new2_forward.1
$region0: #{model_new2_forward.1}
  #allocation0 [shape = 'u32[]', space=smem, size = 0x4, offset = 0x4, fixed_abs, tag = 'smem constant byte address 0x4 - core index']
  #allocation1 [shape = 'u32[144,128]{1,0:T(1,128)}', space=vmem, size = 0x12000, scoped, tag = 'internal scratch']
  #allocation2 [shape = 's32[1]{0:T(128)S(6)}', space=smem, size = 0x200, scoped, tag = 'scoped memory for model_new2_forward.1']
  %s0 = inlined_call_operand.<no memory space> [shape: s32[1], index: 0, kind: input, shape index: {}]
  %s1 = inlined_call_operand.vmem [shape: f32[2], index: 1, kind: input, shape index: {}]
  %s2 = inlined_call_operand.vmem [shape: f32[4,128], index: 2, kind: input, shape index: {}]
  %s3 = inlined_call_operand.vmem [shape: f32[4,8], index: 3, kind: input, shape index: {}]
  %s4 = inlined_call_operand.vmem [shape: f32[8,128], index: 4, kind: output, shape index: {}]
  %s5 = sld [smem:[#allocation0]]
  $region30: #{model_new2_forward.1} parent=0
    _
  %s7 = ssub.s32 1, %s5
  %s8 = scalar_select 0, %s7, %s5
  %9 = sst [smem:[#allocation2]] %s0
  $region1: #{model_new2_forward.1} parent=0
    #allocation3 [shape = 'u8[512]{0}', space=smem, size = 0x200, scoped, tag = 'input window, operand 1, single buffered']
    #allocation4 [shape = 's32[1]{0}', space=sflag, size = 0x4, scoped, tag = 'scoped memory for model_new2_forward.1']
    %10 = vsyncpa [#allocation4], 0
    // Predicated region
    $region2: #{model_new2_forward.1} parent=1 // pred_check
      _
    $region3: #{model_new2_forward.1} parent=1 // pred_check_branch
      %12 = sbr.rel (0) target = $region5
    $region4: #{model_new2_forward.1} parent=1 // pred_region
      _
    $region5: #{model_new2_forward.1} parent=1 // pred_fallthru
      _
    // Predicated region
    $region6: #{model_new2_forward.1} parent=1 // pred_check
      _
    $region7: #{model_new2_forward.1} parent=1 // pred_check_branch
      %14 = sbr.rel (0) target = $region9
    $region8: #{model_new2_forward.1} parent=1 // pred_region
      %s16 = ssub.s32 16, 16
      %17 = vsyncadd [#allocation4], %s16
      %s19 = sshll.u32 %s1, 4
      %s20 = int_to_ptr.vmem [resolvable:$true] %s19
      %22 = dma.vmem_to_smem %s20, 16, [#allocation3], [#allocation4]
    $region9: #{model_new2_forward.1} parent=1 // pred_fallthru
      _
    // Predicated region
    $region10: #{model_new2_forward.1} parent=1 // pred_check
      _
    $region11: #{model_new2_forward.1} parent=1 // pred_check_branch
      %24 = sbr.rel (0) target = $region13
    $region12: #{model_new2_forward.1} parent=1 // pred_region
      _
    $region13: #{model_new2_forward.1} parent=1 // pred_fallthru
      _
    // Predicated region
    $region14: #{model_new2_forward.1} parent=1 // pred_check
      _
    $region15: #{model_new2_forward.1} parent=1 // pred_check_branch
      %26 = sbr.rel (0) target = $region17
    $region16: #{model_new2_forward.1} parent=1 // pred_region
      _
    $region17: #{model_new2_forward.1} parent=1 // pred_fallthru
      _
    // Predicated region
    $region18: #{model_new2_forward.1} parent=1 // pred_check
      _
    $region19: #{model_new2_forward.1} parent=1 // pred_check_branch
      %28 = sbr.rel (0) target = $region21
    $region20: #{model_new2_forward.1} parent=1 // pred_region
      %29 = dma.done [#allocation4], 16
    $region21: #{model_new2_forward.1} parent=1 // pred_fallthru
      _
    %30 = sfence
    %v31 = vld [vmem:[%s2] sm:$0xf]
    %v32 = vld [vmem:[%s3] sm:$0xf]
    %34 = vrot.lane.b32.xlu0 %v31, 127
    %v35 = vpop.permute.xlu0 %34
    %37 = vrot.lane.b32.xlu0 %v31, 120
    %v38 = vpop.permute.xlu0 %37
    %40 = vrot.lane.b32.xlu0 %v31, 119
    %v41 = vpop.permute.xlu0 %40
    %v43 = vlaneseq
    %v44 = vand.u32 %v43, 127
    %vm45 = vcmp.lt.s32.totalorder %v44, 55
    %vm46 = vcmp.lt.s32.totalorder %v44, 0
    %v47 = vsub.s32 0, %v44
    %v48 = vsel %vm46, %v47, %v44
    %v49 = vshrl.u32 %v48, 3
    %v50 = vand.u32 %v48, 7
    %v51 = vsub.s32 0, %v50
    %v52 = vsel %vm46, %v51, %v50
    %vm53 = vcmp.ne.s32.totalorder %v52, 0
    %vm54 = vcmp.lt.s32.totalorder %v52, 0
    %vm55 = vmand %vm54, %vm53
    %v56 = vadd.s32 %v52, 8
    %v57 = vsel %vm55, %v56, %v52
    %vm58 = vcmp.lt.s32.totalorder %v57, 7
    %vm59 = vmand %vm45, %vm58
    %61 = vset.pattern.permute.xlu0 0
    %62 = vperm.xlu0 %61, %v32
    %v63 = vpop.permute.xlu0 %62
    %v65 = vmul.f32 %v31, %v63
    %66 = vset.pattern.permute.xlu0 1
    %67 = vperm.xlu0 %66, %v32
    %v68 = vpop.permute.xlu0 %67
    %v70 = vmul.f32 %v35, %v68
    %v71 = vadd.f32 %v65, %v70
    %72 = vset.pattern.permute.xlu0 2
    %73 = vperm.xlu0 %72, %v32
    %v74 = vpop.permute.xlu0 %73
    %v76 = vmul.f32 %v38, %v74
    %v77 = vadd.f32 %v71, %v76
    %78 = vset.pattern.permute.xlu0 3
    %79 = vperm.xlu0 %78, %v32
    %v80 = vpop.permute.xlu0 %79
    %v82 = vmul.f32 %v41, %v80
    %v83 = vadd.f32 %v77, %v82
    %v85 = vrot.slane %v83, 2
    %v87 = vadd.f32 %v83, %v85
    %s88 = sld [smem:[#allocation3]]
    %v89 = vstv %s88
    %v90 = vadd.f32 %v87, %v89
    %v91 = vsel %vm59, %v90, 0.0
    %vm92 = vcmask 1041408
    %v93 = vsel %vm92, %v91, 0.0
    %v94 = vrot.slane %v93, 4
    %v95 = vadd.f32 %v93, %v94
    %v96 = vrot.slane %v95, 2
    %v97 = vadd.f32 %v95, %v96
    %v98 = vrot.slane %v97, 1
    %v99 = vadd.f32 %v97, %v98
    %v100 = vmul.f32 %v91, %v91
    %v101 = vsel %vm92, %v100, 0.0
    %v102 = vrot.slane %v101, 4
    %v103 = vadd.f32 %v101, %v102
    %v104 = vrot.slane %v103, 2
    %v105 = vadd.f32 %v103, %v104
    %v106 = vrot.slane %v105, 1
    %v107 = vadd.f32 %v105, %v106
    %108 = vadd.xlane.f32.xlu0 %v99
    %v109 = vpop.xlane.xlu0 %108
    %110 = vadd.xlane.f32.xlu0 %v107
    %v111 = vpop.xlane.xlu0 %110
    %v112 = vmul.f32 %v109, 0.010204081
    %v113 = vmul.f32 %v111, 0.010204081
    %v114 = vmul.f32 %v112, %v112
    %v115 = vsub.f32 %v113, %v114
    %v116 = vsub.f32 %v90, %v112
    %v117 = vadd.f32 %v115, 1e-05
    %v118 = vrsqrt.pop %v117
    %v119 = vmul.f32 %v116, %v118
    %120 = vset.pattern.permute.xlu0 4
    %121 = vperm.xlu0 %120, %v32
    %v122 = vpop.permute.xlu0 %121
    %v124 = vmul.f32 %v31, %v122
    %125 = vset.pattern.permute.xlu0 5
    %126 = vperm.xlu0 %125, %v32
    %v127 = vpop.permute.xlu0 %126
    %v129 = vmul.f32 %v35, %v127
    %v130 = vadd.f32 %v124, %v129
    %131 = vset.pattern.permute.xlu0 6
    %132 = vperm.xlu0 %131, %v32
    %v133 = vpop.permute.xlu0 %132
    %v135 = vmul.f32 %v38, %v133
    %v136 = vadd.f32 %v130, %v135
    %137 = vset.pattern.permute.xlu0 7
    %138 = vperm.xlu0 %137, %v32
    %v139 = vpop.permute.xlu0 %138
    %v141 = vmul.f32 %v41, %v139
    %v142 = vadd.f32 %v136, %v141
    %v144 = vrot.slane %v142, 2
    %v146 = vadd.f32 %v142, %v144
    %s147 = sld [smem:[#allocation3 + $0x1]]
    %v148 = vstv %s147
    %v149 = vadd.f32 %v146, %v148
    %v150 = vsel %vm59, %v149, 0.0
    %v151 = vsel %vm92, %v150, 0.0
    %v152 = vrot.slane %v151, 4
    %v153 = vadd.f32 %v151, %v152
    %v154 = vrot.slane %v153, 2
    %v155 = vadd.f32 %v153, %v154
    %v156 = vrot.slane %v155, 1
    %v157 = vadd.f32 %v155, %v156
    %v158 = vmul.f32 %v150, %v150
    %v159 = vsel %vm92, %v158, 0.0
    %v160 = vrot.slane %v159, 4
    %v161 = vadd.f32 %v159, %v160
    %v162 = vrot.slane %v161, 2
    %v163 = vadd.f32 %v161, %v162
    %v164 = vrot.slane %v163, 1
    %v165 = vadd.f32 %v163, %v164
    %166 = vadd.xlane.f32.xlu0 %v157
    %v167 = vpop.xlane.xlu0 %166
    %168 = vadd.xlane.f32.xlu0 %v165
    %v169 = vpop.xlane.xlu0 %168
    %v170 = vmul.f32 %v167, 0.010204081
    %v171 = vmul.f32 %v169, 0.010204081
    %v172 = vmul.f32 %v170, %v170
    %v173 = vsub.f32 %v171, %v172
    %v174 = vsub.f32 %v149, %v170
    %v175 = vadd.f32 %v173, 1e-05
    %v176 = vrsqrt.pop %v175
    %v177 = vmul.f32 %v174, %v176
    %v178 = vlaneseq
    %v179 = vshrl.u32 %v178, 7
    %v180 = vmul.u32 %v179, 128
    %v181 = vadd.s32 %v180, %v44
    %s182 = sld [smem:[#allocation2]]
    %s183 = smul.u32 %s182, 2654435769
    %v184 = vstv %s183
    %v185 = vadd.s32 %v181, %v184
    %v186 = vshrl.u32 %v185, 16
    %v187 = vxor.u32 %v185, %v186
    %v188 = vmul.u32 %v187, 2146121005
    %v189 = vshrl.u32 %v188, 15
    %v190 = vxor.u32 %v188, %v189
    %v191 = vmul.u32 %v190, 2221713035
    %v192 = vshrl.u32 %v191, 16
    %v193 = vxor.u32 %v191, %v192
    %v194 = vshrl.u32 %v193, 9
    %v195 = vcvt.s32.f32 %v194
    %v196 = vmul.f32 %v195, 1.1920929e-07
    %v197 = vand.u32 %v193, 7
    %vm198 = vcmp.eq.s32.totalorder %v197, 7
    %v199 = vmul.f32 %v196, 8.0
    %v200 = vsel %vm198, %v199, 0.0
    %v202 = vrot.slane %v177, 6
    %v205 = vrot.slane %v200, 4
    %v207 = vsel %vm92, %v119, %v202
    %vm208 = vcmask 1043456
    %v209 = vsel %vm208, %v207, %v205
    %210 = vst [vmem:[%s4] sm:$0xff] %v209
    // Predicated region
    $region22: #{model_new2_forward.1} parent=1 // pred_check
      _
    $region23: #{model_new2_forward.1} parent=1 // pred_check_branch
      %212 = sbr.rel (0) target = $region25
    $region24: #{model_new2_forward.1} parent=1 // pred_region
      _
    $region25: #{model_new2_forward.1} parent=1 // pred_fallthru
      _
    // Predicated region
    $region26: #{model_new2_forward.1} parent=1 // pred_check
      _
    $region27: #{model_new2_forward.1} parent=1 // pred_check_branch
      %214 = sbr.rel (0) target = $region29
    $region28: #{model_new2_forward.1} parent=1 // pred_region
      _
    $region29: #{model_new2_forward.1} parent=1 // pred_fallthru
      _
    %215 = vsyncpa [#allocation4], 1

</llo_original>
